<compile_context>
chip_gen: v5e
topology: v5e:2x2
jax: 0.10.0
libtpu: 0.0.40
codegen_flags: <defaults>
</compile_context>

<pallas_src>
import functools

import jax
import jax.numpy as jnp
from jax import lax
from jax.experimental import pallas as pl
from jax.experimental.pallas import tpu as pltpu


def _round_up(x: int, m: int) -> int:
    return ((x + m - 1) // m) * m


def _vmem_budget():
    """Pick (x_block_bytes, vmem_limit_bytes) for the local TPU generation."""
    try:
        cap = int(pltpu.get_tpu_info().vmem_capacity_bytes)
    except Exception:
        cap = 64 * 1024 * 1024  # be conservative if the query is unavailable
    if cap >= 96 * 1024 * 1024:            # v5e / v6e: 128 MiB physical VMEM
        return 12 * 1024 * 1024, 80 * 1024 * 1024
    # v7x: 64 MiB per TensorCore -- keep 2x x-buffers + accumulator well inside it.
    return 8 * 1024 * 1024, 48 * 1024 * 1024


_K_TARGET = 2048  # max feature-tile width (multiple of 128)


def _logreg_kernel(x_ref, w_ref, b_ref, o_ref, *scratch, d_total, tk, needs_mask):
    """One (batch-tile, k-tile) grid step of out = x @ w.T + b."""
    k = pl.program_id(1)

    x = x_ref[...].astype(jnp.float32)          # (tb, tk), streamed in native dtype
    w = w_ref[...].astype(jnp.float32)          # (1, tk) lane-dense weight row
    xw = x * w                                  # VPU multiply, broadcasts over rows

    if needs_mask:
        # Zero out lanes beyond the real feature dim (ragged last k tile / tk > D).
        rem = d_total - k * tk                  # >= tk on every non-final tile
        lane = lax.broadcasted_iota(jnp.int32, xw.shape, 1)
        xw = jnp.where(lane < rem, xw, 0.0)

    # Fold tk lanes down to 128 with pure VPU adds on static, 128-aligned slices
    # (co-issues with the multiplies; no per-step XLU work).
    folded = xw[:, 0:128]
    for c in range(1, tk // 128):
        folded = folded + xw[:, c * 128:(c + 1) * 128]

    if scratch:
        # Multi-step reduction over the feature axis: lane-dense f32 accumulator.
        (acc_ref,) = scratch

        @pl.when(k == 0)
        def _init():
            acc_ref[...] = jnp.zeros_like(acc_ref)

        acc_ref[...] += folded

        @pl.when(k == pl.num_programs(1) - 1)
        def _finalize():
            out = jnp.sum(acc_ref[...], axis=-1, keepdims=True) + b_ref[0]
            o_ref[...] = out.astype(o_ref.dtype)
    else:
        # Whole feature dim fits one block: single cross-lane reduce, no scratch.
        out = jnp.sum(folded, axis=-1, keepdims=True) + b_ref[0]
        o_ref[...] = out.astype(o_ref.dtype)


def logistic_regression_forward(x, weight, bias, *, x_block_bytes=None, k_block=None):
    """x: (B, D); weight: (1, D) as in nn.Linear; bias: (1,). Returns (B, 1)."""
    B, D = x.shape
    itemsize = x.dtype.itemsize

    default_block_bytes, vmem_limit = _vmem_budget()
    if x_block_bytes is None:
        x_block_bytes = default_block_bytes

    # Feature tile: multiple of 128 lanes; one block covers the whole feature dim
    # for typical logistic-regression sizes (grid_k == 1).
    if k_block is not None:
        if k_block <= 0 or k_block % 128 != 0:
            raise ValueError("k_block must be a positive multiple of 128")
        tk = int(k_block)
    else:
        tk = min(_K_TARGET, _round_up(D, 128))

    # Batch tile: sized from the real input itemsize and the VMEM byte budget,
    # capped only by the (sublane-rounded) batch itself.  No wrapper padding.
    tb = max(8, (x_block_bytes // (tk * itemsize)) // 8 * 8)
    tb = min(tb, _round_up(B, 8))

    grid_i = pl.cdiv(B, tb)
    grid_k = pl.cdiv(D, tk)
    needs_mask = (D % tk) != 0

    kernel = functools.partial(
        _logreg_kernel, d_total=D, tk=tk, needs_mask=needs_mask)

    scratch_shapes = [pltpu.VMEM((tb, 128), jnp.float32)] if grid_k > 1 else []

    b_smem = bias.reshape((1,)).astype(jnp.float32)

    out = pl.pallas_call(
        kernel,
        out_shape=jax.ShapeDtypeStruct((B, 1), x.dtype),
        grid_spec=pltpu.PrefetchScalarGridSpec(
            num_scalar_prefetch=0,
            grid=(grid_i, grid_k),
            in_specs=[
                pl.BlockSpec((tb, tk), lambda i, k: (i, k)),          # x tile
                pl.BlockSpec((1, tk), lambda i, k: (0, k)),           # weight row
                pl.BlockSpec(memory_space=pltpu.MemorySpace.SMEM),    # bias scalar
            ],
            out_specs=pl.BlockSpec((tb, 1), lambda i, k: (i, 0)),
            scratch_shapes=scratch_shapes,
        ),
        # Batch axis "parallel" (shardable across v7x's 2 TensorCores); feature
        # axis is the reduction -> "arbitrary".  If profiling on v7x shows one
        # idle core, switch the first entry to pltpu.CORE_PARALLEL.
        compiler_params=pltpu.CompilerParams(
            dimension_semantics=("parallel", "arbitrary"),
            vmem_limit_bytes=vmem_limit,
        ),
    )(x, weight, b_smem)

    return out


def _init_params(key, input_dim):
    # Deterministic init mimicking nn.Linear's uniform(-1/sqrt(D), 1/sqrt(D)).
    kw, kb = jax.random.split(key)
    bound = 1.0 / (float(input_dim) ** 0.5)
    weight = jax.random.uniform(kw, (1, input_dim), jnp.float32, -bound, bound)
    bias = jax.random.uniform(kb, (1,), jnp.float32, -bound, bound)
    return weight, bias


def _reference(x, weight, bias):
    return jnp.dot(x, weight.T, precision=lax.Precision.HIGHEST) + bias


if __name__ == "__main__":
    key = jax.random.PRNGKey(0)
    kx, kp, kx2, kp2 = jax.random.split(key, 4)

    # Test 1: small shapes consistent with the module (single-tile path, D < 128).
    batch, input_dim = 8, 32
    x = jax.random.normal(kx, (batch, input_dim), dtype=jnp.float32)
    weight, bias = _init_params(kp, input_dim)

    out = logistic_regression_forward(x, weight, bias)
    jax.block_until_ready(out)

    ref = _reference(x, weight, bias)
    assert out.shape == (batch, 1)
    assert jnp.allclose(out, ref, atol=1e-5, rtol=1e-5), "mismatch vs reference"

    # Test 2: force multi-tile batch + multi-step feature reduction + ragged tiles
    # (no wrapper padding anywhere; masking / partial-block paths exercised).
    batch2, dim2 = 52, 300
    x2 = jax.random.normal(kx2, (batch2, dim2), dtype=jnp.float32)
    w2, b2 = _init_params(kp2, dim2)
    out2 = logistic_regression_forward(x2, w2, b2, x_block_bytes=8 * 1024, k_block=128)
    jax.block_until_ready(out2)

    ref2 = _reference(x2, w2, b2)
    assert out2.shape == (batch2, 1)
    assert jnp.allclose(out2, ref2, atol=1e-5, rtol=1e-5), "tiled mismatch vs reference"

    print("KERNEL_OK")
</pallas_src>

<mosaic_0001>
module attributes {stable_mosaic.version = 11 : i64} {
  func.func @_logreg_kernel(%arg0: i32, %arg1: i32, %arg2: memref<8x128xf32, #tpu.memory_space<vmem>>, %arg3: memref<1x128xf32, #tpu.memory_space<vmem>>, %arg4: memref<1xf32, #tpu.memory_space<smem>>, %arg5: memref<8x1xf32, #tpu.memory_space<vmem>>) attributes {dimension_semantics = [#tpu.dimension_semantics<parallel>, #tpu.dimension_semantics<arbitrary>], iteration_bounds = array<i64: 1, 1>, scalar_prefetch = 0 : i64, scratch_operands = 0 : i64, tpu.core_type = #tpu.core_type<tc>, window_params = [{transform_indices = @transform_0, window_bounds = array<i64: 8, 128>}, {transform_indices = @transform_1, window_bounds = array<i64: 1, 128>}, {transform_indices = @transform_2, window_bounds = array<i64: 1>}, {transform_indices = @transform_3, window_bounds = array<i64: 8, 1>}]} {
    %c0 = arith.constant 0 : index
    %c0_0 = arith.constant 0 : index
    %0 = vector.load %arg2[%c0, %c0_0] : memref<8x128xf32, #tpu.memory_space<vmem>>, vector<8x128xf32>
    %c0_1 = arith.constant 0 : index
    %c0_2 = arith.constant 0 : index
    %1 = vector.load %arg3[%c0_1, %c0_2] : memref<1x128xf32, #tpu.memory_space<vmem>>, vector<1x128xf32>
    %2 = vector.broadcast %1 : vector<1x128xf32> to vector<8x128xf32>
    %3 = arith.mulf %0, %2 : vector<8x128xf32>
    %c128_i32 = arith.constant 128 : i32
    %4 = arith.muli %arg1, %c128_i32 : i32
    %c32_i32 = arith.constant 32 : i32
    %5 = arith.subi %c32_i32, %4 : i32
    %6 = tpu.iota {dimensions = array<i32: 1>} : vector<8x128xi32>
    %7 = vector.broadcast %5 : i32 to vector<8x128xi32>
    %8 = arith.cmpi slt, %6, %7 : vector<8x128xi32>
    %cst = arith.constant 0.000000e+00 : f32
    %9 = vector.broadcast %cst : f32 to vector<8x128xf32>
    %10 = arith.select %8, %3, %9 : vector<8x128xi1>, vector<8x128xf32>
    %cst_3 = arith.constant dense<0.000000e+00> : vector<8xf32>
    %11 = vector.multi_reduction <add>, %10, %cst_3 [1] : vector<8x128xf32> to vector<8xf32>
    %12 = vector.shape_cast %11 : vector<8xf32> to vector<8x1xf32>
    %c0_4 = arith.constant 0 : index
    %13 = memref.load %arg4[%c0_4] : memref<1xf32, #tpu.memory_space<smem>>
    %14 = vector.broadcast %13 : f32 to vector<8x1xf32>
    %15 = arith.addf %12, %14 : vector<8x1xf32>
    %c0_5 = arith.constant 0 : index
    %c0_6 = arith.constant 0 : index
    %16 = vector.load %arg5[%c0_5, %c0_6] : memref<8x1xf32, #tpu.memory_space<vmem>>, vector<8x1xf32>
    tpu.vector_store %arg5[%c0_5, %c0_6], %15 {strides = array<i32>} : memref<8x1xf32, #tpu.memory_space<vmem>>, vector<8x1xf32>,
    return
  }
  func.func @transform_0(%arg0: i32, %arg1: i32) -> (i32, i32) {
    %c0_i32 = arith.constant 0 : i32
    return %arg0, %arg1 : i32, i32
  }
  func.func @transform_1(%arg0: i32, %arg1: i32) -> (i32, i32) {
    %c0_i32 = arith.constant 0 : i32
    %c0_i32_0 = arith.constant 0 : i32
    return %c0_i32, %arg1 : i32, i32
  }
  func.func @transform_2(%arg0: i32, %arg1: i32) -> i32 {
    %c0_i32 = arith.constant 0 : i32
    %c0_i32_0 = arith.constant 0 : i32
    return %c0_i32 : i32
  }
  func.func @transform_3(%arg0: i32, %arg1: i32) -> (i32, i32) {
    %c0_i32 = arith.constant 0 : i32
    %c0_i32_0 = arith.constant 0 : i32
    return %arg0, %c0_i32 : i32, i32
  }
}

</mosaic_0001>

<llo_original>
// kernel: tpu_custom_call.1
$region0: #{tpu_custom_call.1}
  #allocation0 [shape = 'u32[]', space=smem, size = 0x4, offset = 0x4, fixed_abs, tag = 'smem constant byte address 0x4 - core index']
  #allocation1 [shape = 'u32[72,128]{1,0:T(1,128)}', space=vmem, size = 0x9000, scoped, tag = 'internal scratch']
  #allocation2 [shape = 'f32[1]{0:T(128)S(6)}', space=smem, size = 0x200, scoped, tag = 'scoped memory for tpu_custom_call.1']
  %s0 = inlined_call_operand.hbm [shape: f32[8,32], index: 0, kind: input, shape index: {}]
  %s1 = inlined_call_operand.vmem [shape: f32[1,32], index: 1, kind: input, shape index: {}]
  %s2 = inlined_call_operand.<no memory space> [shape: f32[1], index: 2, kind: input, shape index: {}]
  %s3 = inlined_call_operand.vmem [shape: f32[8,1], index: 3, kind: output, shape index: {}]
  %s4 = sld [smem:[#allocation0]]
  $region26: #{tpu_custom_call.1} parent=0
    _
  %s6 = ssub.s32 1, %s4
  %s7 = scalar_select 0, %s6, %s4
  %8 = sst [smem:[#allocation2]] %s2
  $region1: #{tpu_custom_call.1} parent=0
    #allocation3 [shape = 'u8[4096]{0}', space=vmem, size = 0x1000, scoped, tag = 'input window, operand 0, single buffered']
    #allocation4 [shape = 's32[1]{0}', space=sflag, size = 0x4, scoped, tag = 'scoped memory for tpu_custom_call.1']
    %9 = vsyncpa [#allocation4], 0
    // Predicated region
    $region2: #{tpu_custom_call.1} parent=1 // pred_check
      _
    $region3: #{tpu_custom_call.1} parent=1 // pred_check_branch
      %11 = sbr.rel (0) target = $region5
    $region4: #{tpu_custom_call.1} parent=1 // pred_region
      %13 = vsyncadd [#allocation4], 0
      %s15 = sshll.u32 %s0, 4
      %s16 = int_to_ptr.hbm [resolvable:$true] %s15
      %s17 = sshll.u32 [#allocation3], 4
      %s18 = int_to_ptr.vmem [resolvable:$true] %s17
      %20 = dma.hbm_to_vmem [thread:$0]  %s16, 128, %s18, [#allocation4]
    $region5: #{tpu_custom_call.1} parent=1 // pred_fallthru
      _
    // Predicated region
    $region6: #{tpu_custom_call.1} parent=1 // pred_check
      _
    $region7: #{tpu_custom_call.1} parent=1 // pred_check_branch
      %22 = sbr.rel (0) target = $region9
    $region8: #{tpu_custom_call.1} parent=1 // pred_region
      _
    $region9: #{tpu_custom_call.1} parent=1 // pred_fallthru
      _
    // Predicated region
    $region10: #{tpu_custom_call.1} parent=1 // pred_check
      _
    $region11: #{tpu_custom_call.1} parent=1 // pred_check_branch
      %24 = sbr.rel (0) target = $region13
    $region12: #{tpu_custom_call.1} parent=1 // pred_region
      _
    $region13: #{tpu_custom_call.1} parent=1 // pred_fallthru
      _
    // Predicated region
    $region14: #{tpu_custom_call.1} parent=1 // pred_check
      _
    $region15: #{tpu_custom_call.1} parent=1 // pred_check_branch
      %26 = sbr.rel (0) target = $region17
    $region16: #{tpu_custom_call.1} parent=1 // pred_region
      %28 = dma.done [#allocation4], 128
    $region17: #{tpu_custom_call.1} parent=1 // pred_fallthru
      _
    %v29 = vld [vmem:[#allocation3] sm:$0xff]
    %v30 = vld [vmem:[%s1] sm:$0x1]
    %v32 = vperm.slane %v30, 0
    %v34 = vmul.f32 %v29, %v32
    %s35 = smul.u32 0, 128
    %s36 = ssub.s32 32, %s35
    %v37 = vlaneseq
    %v38 = vand.u32 %v37, 127
    %v39 = vstv %s36
    %vm40 = vcmp.lt.s32.totalorder %v38, %v39
    %v41 = vsel %vm40, %v34, 0.0
    %42 = vadd.xlane.f32.xlu0 %v41
    %v43 = vpop.xlane.xlu0 %42
    %s44 = sld [smem:[#allocation2]]
    %v45 = vstv %s44
    %v46 = vadd.f32 %v43, %v45
    %vm47 = vcmask 7168
    %48 = vst.msk [vmem:[%s3] sm:$0xff] %vm47, %v46
    // Predicated region
    $region18: #{tpu_custom_call.1} parent=1 // pred_check
      _
    $region19: #{tpu_custom_call.1} parent=1 // pred_check_branch
      %50 = sbr.rel (0) target = $region21
    $region20: #{tpu_custom_call.1} parent=1 // pred_region
      _
    $region21: #{tpu_custom_call.1} parent=1 // pred_fallthru
      _
    // Predicated region
    $region22: #{tpu_custom_call.1} parent=1 // pred_check
      _
    $region23: #{tpu_custom_call.1} parent=1 // pred_check_branch
      %52 = sbr.rel (0) target = $region25
    $region24: #{tpu_custom_call.1} parent=1 // pred_region
      _
    $region25: #{tpu_custom_call.1} parent=1 // pred_fallthru
      _
    %53 = vsyncpa [#allocation4], 1

</llo_original>
